<compile_context>
chip_gen: v6e
topology: v6e:2x2x1
jax: 0.10.0
libtpu: 0.0.40
codegen_flags: <defaults>
</compile_context>

<pallas_src>
import jax
import jax.numpy as jnp
from jax import lax
from jax.experimental import pallas as pl
from jax.experimental.pallas import tpu as pltpu


def _pad_to(x, m):
    return -(-x // m) * m


def _largest_divisor_leq(n, cap):
    cap = max(1, min(n, cap))
    for d in range(cap, 0, -1):
        if n % d == 0:
            return d
    return 1


def _make_kernel(ng_chunk, e_true):
    """Kernel factory: ng_chunk divides the Ng block; e_true is the un-padded feature dim."""
    inv_e = 1.0 / float(e_true)

    def kernel(c_ref, w_ref, cand_ref, out_ref):
        # c_ref:    (tS, A)      context tile (shared across all K predictors / Ng)
        # w_ref:    (E, A)       predictor-k weight in torch (out_features, in_features) layout
        # cand_ref: (Ng, tS, E)  candidate tile for predictor k, batch b, S-tile s (f32 or bf16)
        # out_ref:  (Ng, tS)     mean over the feature axis E (f32)
        ng, ts, e = cand_ref.shape
        a = w_ref.shape[-1]
        n_chunks = ng // ng_chunk

        c32 = c_ref[...].astype(jnp.float32)                     # (tS, A), VPU side stays f32
        w_op = w_ref[...].astype(cand_ref.dtype)                 # match MXU operand dtype

        def chunk(g0):
            cand = cand_ref[pl.ds(g0, ng_chunk), :, :]           # (ng_chunk, tS, E)
            # Reassociated mean-over-E on the MXU (contracts E, f32 accumulation).
            t = jnp.dot(cand.reshape(ng_chunk * ts, e), w_op,
                        preferred_element_type=jnp.float32)      # (ng_chunk*tS, A)
            t = t.reshape(ng_chunk, ts, a)
            # Small A-wide reduce instead of an E-wide lane reduce over a full f32 product.
            out = jnp.sum(t * c32[None, :, :], axis=-1) * inv_e  # divide by TRUE E
            out_ref[pl.ds(g0, ng_chunk), :] = out.astype(out_ref.dtype)

        if n_chunks == 1:
            chunk(0)
        else:
            def body(i, carry):
                chunk(pl.multiple_of(i * ng_chunk, ng_chunk))
                return carry
            lax.fori_loop(0, n_chunks, body, 0,
                          unroll=True if n_chunks <= 8 else 4)

    return kernel


def _pick_s_tile(S, Ng, E, A, cand_itemsize, c_itemsize, ng_chunk, budget_bytes):
    """Largest S-tile whose honest (lane-padded, double-buffered) footprint fits the budget."""
    E_pad = _pad_to(E, 128)
    A_pad = _pad_to(A, 128)
    # Fixed footprint: double-buffered (E, A) weight block (f32).
    fixed = 2 * _pad_to(E, 8) * A_pad * 4
    # Per-S-row footprint:
    per_row = (2 * Ng * E_pad * cand_itemsize        # candidate block, double-buffered
               + 2 * ng_chunk * A_pad * 4            # f32 matmul result + product temp
               + 2 * _pad_to(Ng, 8) * 4              # output block (lane dim is tS)
               + 2 * A_pad * c_itemsize)             # context block
    avail = max(budget_bytes - fixed, per_row * 8)
    max_rows = max(8, avail // per_row)
    if S <= max_rows:
        return S, 1
    # A tile smaller than S must be a 128-multiple (output lane dim); prefer one dividing S.
    ts = (max_rows // 128) * 128
    while ts >= 128 and S % ts != 0:
        ts -= 128
    if ts < 128:
        # No 128-multiple divisor of S fits: take the largest 128-multiple tile and let
        # Pallas clip the ragged last block (out-of-bounds rows are masked on writeback).
        ts = max(128, (max_rows // 128) * 128)
    return ts, pl.cdiv(S, ts)


def prediction_network_forward(c, candidates, weights, *, vmem_budget_bytes=None):
    """Default (nn.Linear, bias=False) PredictionNetwork forward.

    c:          (B, S, A)          context sequence (A = dimOutputAR)
    candidates: (K, B, Ng, S, E)   native layout; f32 or bf16 (bf16 halves the dominant stream)
    weights:    (K, E, A)          torch nn.Linear weight layout (out_features, in_features)

    Returns a stacked (K, B, Ng, S) float32 array; out[k] equals the k-th element of the
    PyTorch module's output list.
    """
    K, B, Ng, S, E = candidates.shape
    A = c.shape[-1]
    assert c.shape == (B, S, A), c.shape
    assert weights.shape == (K, E, A), weights.shape

    cand_isz = jnp.dtype(candidates.dtype).itemsize
    c_isz = jnp.dtype(c.dtype).itemsize
    w_isz = jnp.dtype(weights.dtype).itemsize
    A_pad = _pad_to(A, 128)

    # Generation-aware VMEM budget: v7x has 64 MiB per TensorCore, v5e/v6e have 128 MiB.
    try:
        vmem_cap = int(pltpu.get_tpu_info().vmem_capacity_bytes)
    except Exception:
        vmem_cap = 64 << 20  # conservative fallback
    if vmem_cap <= (64 << 20):                      # v7x-class
        default_budget, vmem_limit = 36 << 20, 52 << 20
    else:                                           # v5e / v6e-class
        default_budget, vmem_limit = 32 << 20, 96 << 20
    budget = default_budget if vmem_budget_bytes is None else int(vmem_budget_bytes)

    # Pass 1: tile S assuming the whole-Ng f32 intermediate is live.
    tS, n_s = _pick_s_tile(S, Ng, E, A, cand_isz, c_isz, Ng, budget)
    # Bound the live f32 (ng_chunk*tS, A) matmul intermediate to ~4 MiB, then retile.
    cap_rows = max(1, (4 << 20) // max(1, 2 * tS * A_pad * 4))
    ng_chunk = _largest_divisor_leq(Ng, cap_rows)
    if ng_chunk < Ng:
        tS, n_s = _pick_s_tile(S, Ng, E, A, cand_isz, c_isz, ng_chunk, budget)

    out_bytes = K * B * Ng * S * 4
    cost = pl.CostEstimate(
        flops=2 * K * B * Ng * S * E * A,
        transcendentals=0,
        bytes_accessed=(K * B * Ng * S * E * cand_isz    # dominant candidate stream
                        + K * B * S * A * c_isz          # context re-read per predictor
                        + K * B * E * A * w_isz          # weight re-fetch per (k, b)
                        + out_bytes),
    )

    out = pl.pallas_call(
        _make_kernel(ng_chunk, E),
        out_shape=jax.ShapeDtypeStruct((K, B, Ng, S), jnp.float32),
        grid_spec=pltpu.PrefetchScalarGridSpec(
            num_scalar_prefetch=0,
            # K outermost keeps the (E, A) weight block index constant over the inner B x S
            # loop (no re-DMA); all three axes are independent, so megacore chips can split
            # the full K*B*n_s product across TensorCores.
            grid=(K, B, n_s),
            in_specs=[
                # context tile, reused by every predictor k
                pl.BlockSpec((pl.Squeezed(), tS, A), lambda k, b, s: (b, s, 0)),
                # per-predictor weight in native (E, A) layout (tiny; re-fetch is cheap)
                pl.BlockSpec((pl.Squeezed(), E, A), lambda k, b, s: (k, 0, 0)),
                # candidates in native (K, B, Ng, S, E) layout -- no wrapper transpose
                pl.BlockSpec((pl.Squeezed(), pl.Squeezed(), Ng, tS, E),
                             lambda k, b, s: (k, b, 0, s, 0)),
            ],
            out_specs=pl.BlockSpec((pl.Squeezed(), pl.Squeezed(), Ng, tS),
                                   lambda k, b, s: (k, b, 0, s)),
        ),
        compiler_params=pltpu.CompilerParams(
            dimension_semantics=("parallel", "parallel", "parallel"),
            vmem_limit_bytes=vmem_limit,
        ),
        cost_estimate=cost,
    )(c, weights, candidates)

    return out


def reference_forward(c, candidates, weights):
    """Pure-JAX replica of PredictionNetwork.forward (default Linear path), stacked over k."""
    locC = jnp.einsum("bsa,kea->kbse",
                      c.astype(jnp.float32), weights.astype(jnp.float32))   # Linear, no bias
    prod = locC[:, :, None, :, :] * candidates.astype(jnp.float32)          # broadcast over Ng
    return prod.mean(axis=-1)                                               # mean over E


def init_weights(key, nPredicts, dimOutputAR, dimOutputEncoder, residual_std=0.01):
    """Mirrors the module's init: top (A,A) block ~ N(0,1), extra rows scaled by 0.01."""
    ws = []
    for _ in range(nPredicts):
        k1, k2, key = jax.random.split(key, 3)
        top = jax.random.normal(k1, (dimOutputAR, dimOutputAR), jnp.float32)
        if dimOutputEncoder > dimOutputAR:
            res = residual_std * jax.random.normal(
                k2, (dimOutputEncoder - dimOutputAR, dimOutputAR), jnp.float32
            )
            w = jnp.concatenate([top, res], axis=0)  # (E, A)
        else:
            w = top[:dimOutputEncoder]
        ws.append(w)
    return jnp.stack(ws, axis=0)  # (K, E, A)


if __name__ == "__main__":
    # Small, module-consistent shapes.
    B, S = 2, 16             # batch, sequence
    A = 32                   # dimOutputAR
    E = 48                   # dimOutputEncoder (> A -> residual init branch)
    K = 4                    # nPredicts
    Ng = 3                   # number of candidates per prediction step

    key = jax.random.PRNGKey(0)
    kc, kcand, kw = jax.random.split(key, 3)

    c = jax.random.normal(kc, (B, S, A), jnp.float32)
    cand_f32 = jax.random.normal(kcand, (K, B, Ng, S, E), jnp.float32)
    weights = init_weights(kw, K, A, E)

    # --- f32 candidate path: matches the PyTorch module bit-for-intent (reassociation only) ---
    out_f32 = jax.block_until_ready(prediction_network_forward(c, cand_f32, weights))
    ref_f32 = reference_forward(c, cand_f32, weights)
    assert out_f32.shape == (K, B, Ng, S), out_f32.shape
    assert jnp.allclose(out_f32, ref_f32, rtol=1e-3, atol=1e-3), \
        float(jnp.abs(out_f32 - ref_f32).max())

    # --- bf16-streamed candidates: halves the dominant HBM stream, f32 accumulation ---
    cand_bf16 = cand_f32.astype(jnp.bfloat16)
    out_bf16 = jax.block_until_ready(prediction_network_forward(c, cand_bf16, weights))
    ref_bf16 = reference_forward(
        c,
        cand_bf16.astype(jnp.float32),
        weights.astype(jnp.bfloat16).astype(jnp.float32),  # quantization-matched reference
    )
    assert out_bf16.shape == (K, B, Ng, S), out_bf16.shape
    assert jnp.allclose(out_bf16, ref_bf16, rtol=2e-2, atol=2e-2), \
        float(jnp.abs(out_bf16 - ref_bf16).max())

    print("KERNEL_OK")
</pallas_src>

<mosaic_0001>
module attributes {stable_mosaic.version = 11 : i64} {
  func.func @kernel(%arg0: i32, %arg1: i32, %arg2: i32, %arg3: memref<1x16x32xf32, #tpu.memory_space<vmem>>, %arg4: memref<1x48x32xf32, #tpu.memory_space<vmem>>, %arg5: memref<1x1x3x16x48xf32, #tpu.memory_space<vmem>>, %arg6: memref<1x1x3x16xf32, #tpu.memory_space<vmem>>) attributes {dimension_semantics = [#tpu.dimension_semantics<parallel>, #tpu.dimension_semantics<parallel>, #tpu.dimension_semantics<parallel>], iteration_bounds = array<i64: 4, 2, 1>, scalar_prefetch = 0 : i64, scratch_operands = 0 : i64, tpu.core_type = #tpu.core_type<tc>, window_params = [{transform_indices = @transform_0, window_bounds = array<i64: 1, 16, 32>}, {transform_indices = @transform_1, window_bounds = array<i64: 1, 48, 32>}, {transform_indices = @transform_2, window_bounds = array<i64: 1, 1, 3, 16, 48>}, {transform_indices = @transform_3, window_bounds = array<i64: 1, 1, 3, 16>}]} {
    %c0 = arith.constant 0 : index
    %c0_0 = arith.constant 0 : index
    %c0_1 = arith.constant 0 : index
    %0 = vector.load %arg3[%c0, %c0_0, %c0_1] : memref<1x16x32xf32, #tpu.memory_space<vmem>>, vector<1x16x32xf32>
    %1 = vector.shape_cast %0 : vector<1x16x32xf32> to vector<16x32xf32>
    %c0_2 = arith.constant 0 : index
    %c0_3 = arith.constant 0 : index
    %c0_4 = arith.constant 0 : index
    %2 = vector.load %arg4[%c0_2, %c0_3, %c0_4] : memref<1x48x32xf32, #tpu.memory_space<vmem>>, vector<1x48x32xf32>
    %3 = vector.shape_cast %2 : vector<1x48x32xf32> to vector<48x32xf32>
    %c0_5 = arith.constant 0 : index
    %c0_6 = arith.constant 0 : index
    %c0_7 = arith.constant 0 : index
    %c0_8 = arith.constant 0 : index
    %c0_9 = arith.constant 0 : index
    %4 = vector.load %arg5[%c0_5, %c0_6, %c0_7, %c0_8, %c0_9] : memref<1x1x3x16x48xf32, #tpu.memory_space<vmem>>, vector<1x1x3x16x48xf32>
    %5 = vector.shape_cast %4 : vector<1x1x3x16x48xf32> to vector<3x16x48xf32>
    %6 = vector.shape_cast %5 : vector<3x16x48xf32> to vector<48x48xf32>
    %cst = arith.constant dense<0.000000e+00> : vector<48x32xf32>
    %7 = tpu.matmul %6, %3, %cst {dimension_numbers = #tpu.dot_dimension_numbers<[1], [0], [0], [1], [0, 0, 1, 1], [], []>} : vector<48x48xf32>, vector<48x32xf32>, vector<48x32xf32> -> vector<48x32xf32>
    %8 = vector.shape_cast %7 : vector<48x32xf32> to vector<3x16x32xf32>
    %9 = vector.shape_cast %1 : vector<16x32xf32> to vector<1x16x32xf32>
    %10 = vector.broadcast %9 : vector<1x16x32xf32> to vector<3x16x32xf32>
    %11 = arith.mulf %8, %10 : vector<3x16x32xf32>
    %cst_10 = arith.constant dense<0.000000e+00> : vector<3x16xf32>
    %12 = vector.multi_reduction <add>, %11, %cst_10 [2] : vector<3x16x32xf32> to vector<3x16xf32>
    %cst_11 = arith.constant 0.020833334 : f32
    %13 = vector.broadcast %cst_11 : f32 to vector<3x16xf32>
    %14 = arith.mulf %12, %13 : vector<3x16xf32>
    %c0_12 = arith.constant 0 : index
    %c0_13 = arith.constant 0 : index
    %c0_14 = arith.constant 0 : index
    %c0_15 = arith.constant 0 : index
    %15 = vector.load %arg6[%c0_12, %c0_13, %c0_14, %c0_15] : memref<1x1x3x16xf32, #tpu.memory_space<vmem>>, vector<1x1x3x16xf32>
    %16 = vector.shape_cast %15 : vector<1x1x3x16xf32> to vector<3x16xf32>
    %17 = vector.shape_cast %14 : vector<3x16xf32> to vector<1x1x3x16xf32>
    tpu.vector_store %arg6[%c0_12, %c0_13, %c0_14, %c0_15], %17 {strides = array<i32>} : memref<1x1x3x16xf32, #tpu.memory_space<vmem>>, vector<1x1x3x16xf32>,
    return
  }
  func.func @transform_0(%arg0: i32, %arg1: i32, %arg2: i32) -> (i32, i32, i32) {
    %c0_i32 = arith.constant 0 : i32
    %c0_i32_0 = arith.constant 0 : i32
    return %arg1, %arg2, %c0_i32 : i32, i32, i32
  }
  func.func @transform_1(%arg0: i32, %arg1: i32, %arg2: i32) -> (i32, i32, i32) {
    %c0_i32 = arith.constant 0 : i32
    %c0_i32_0 = arith.constant 0 : i32
    %c0_i32_1 = arith.constant 0 : i32
    return %arg0, %c0_i32, %c0_i32_0 : i32, i32, i32
  }
  func.func @transform_2(%arg0: i32, %arg1: i32, %arg2: i32) -> (i32, i32, i32, i32, i32) {
    %c0_i32 = arith.constant 0 : i32
    %c0_i32_0 = arith.constant 0 : i32
    %c0_i32_1 = arith.constant 0 : i32
    return %arg0, %arg1, %c0_i32, %arg2, %c0_i32_0 : i32, i32, i32, i32, i32
  }
  func.func @transform_3(%arg0: i32, %arg1: i32, %arg2: i32) -> (i32, i32, i32, i32) {
    %c0_i32 = arith.constant 0 : i32
    %c0_i32_0 = arith.constant 0 : i32
    return %arg0, %arg1, %c0_i32, %arg2 : i32, i32, i32, i32
  }
}

</mosaic_0001>

<llo_original>
// kernel: tpu_custom_call.1
$region0: #{tpu_custom_call.1}
  #allocation0 [shape = 'u32[]', space=smem, size = 0x4, offset = 0x4, fixed_abs, tag = 'smem constant byte address 0x4 - core index']
  #allocation1 [shape = 'u32[144,128]{1,0:T(1,128)}', space=vmem, size = 0x12000, scoped, tag = 'internal scratch']
  %s0 = inlined_call_operand.vmem [shape: f32[2,16,32], index: 0, kind: input, shape index: {}]
  %s1 = inlined_call_operand.vmem [shape: f32[4,48,32], index: 1, kind: input, shape index: {}]
  %s2 = inlined_call_operand.hbm [shape: f32[4,2,3,16,48], index: 2, kind: input, shape index: {}]
  %s3 = inlined_call_operand.vmem [shape: f32[4,2,3,16], index: 3, kind: output, shape index: {}]
  %s4 = sld [smem:[#allocation0]]
  $region49: #{tpu_custom_call.1} parent=0
    _
  %s6 = ssub.s32 1, %s4
  %s7 = scalar_select 0, %s6, %s4
  $region1: #{tpu_custom_call.1} parent=0
    #allocation2 [shape = 'u8[49152]{0}', space=vmem, size = 0xc000, scoped, tag = 'input window, operand 2']
    #allocation3 [shape = 's32[2]{0}', space=sflag, size = 0x8, scoped, tag = 'scoped memory for tpu_custom_call.1']
    %8 = vsyncpa [#allocation3], 0
    %s9 = scalar_lea.sflag [#allocation3], 1
    %10 = vsyncpa %s9, 0
    loop: start=0, step=1, limit=10
    $region2: #{tpu_custom_call.1} parent=1 // loop_pre_header
      _
    $region3: #{tpu_custom_call.1} parent=1 // loop_header
      %s12 = sphi 0, %s16
      %p13 = scmp.ge.s32.totalorder %s12, 10
      %s19 = sphi 0, %s38
      %s20 = sphi 0, %s34
      %s21 = sphi 0, %s30
      %s22 = sphi 0, %s19
      %s23 = sphi 0, %s20
      %s24 = sphi 0, %s21
      %s25 = sphi 0, %s22
      %s26 = sphi 0, %s23
      %s27 = sphi 0, %s24
      %s43 = sphi 0, %s45
      %s46 = sphi 0, %s43
      %s47 = sphi 0, %s46
      %s63 = sphi 0, %s47
      %s69 = sphi 0, %s71
      %s72 = sphi 0, %s69
      %s73 = sphi 0, %s72
      %s89 = sphi 0, %s73
      %s99 = sphi 0, %s101
      %s102 = sphi 0, %s99
      %s103 = sphi 0, %s102
      %s119 = sphi 0, %s103
      %s129 = sphi 0, %s131
      %s132 = sphi 0, %s129
      %s133 = sphi 0, %s132
      %s149 = sphi 0, %s133
    $region4: #{tpu_custom_call.1} parent=1 // loop_header_branch
      %15 = sbr.rel (%p13) target = $region8
    $region5: #{tpu_custom_call.1} parent=1 // loop_body
      %s17 = ssub.s32 %s12, 1
      %s18 = ssub.s32 %s12, 2
      %s28 = sadd.s32 1, %s21
      %p29 = scmp.ge.s32.totalorder %s28, 1
      %s30 = scalar_select %p29, 0, %s28
      %s31 = sadd.s32 1, %s20
      %s32 = scalar_select %p29, %s31, %s20
      %p33 = scmp.ge.s32.totalorder %s32, 2
      %s34 = scalar_select %p33, 0, %s32
      %s35 = sadd.s32 1, %s19
      %s36 = scalar_select %p33, %s35, %s19
      %p37 = scmp.ge.s32.totalorder %s36, 4
      %s38 = scalar_select %p37, 0, %s36
      %s39 = ssub.s32 %s20, %s34
      %s40 = ssub.s32 %s21, %s30
      %s41 = sor.u32 %s39, %s40
      %p42 = scmp.eq.s32.totalorder %s41, 0
      %s44 = sadd.s32 %s43, 1
      %s45 = scalar_select %p42, %s43, %s44
      %p48 = pneg %p42
      %p49 = scmp.eq.s32.totalorder %s12, 7
      %p50 = por %p48, %p49
      %p51 = scmp.ne.s32.totalorder %s43, %s46
      %p52 = scmp.eq.s32.totalorder %s12, 0
      %p53 = por %p51, %p52
      %p54 = scmp.ne.s32.totalorder %s43, %s46
      %p55 = scmp.eq.s32.totalorder %s17, 7
      %p56 = por %p54, %p55
      %p57 = scmp.ne.s32.totalorder %s46, %s47
      %p58 = scmp.eq.s32.totalorder %s17, 0
      %p59 = por %p57, %p58
      %p60 = scmp.ne.s32.totalorder %s46, %s47
      %p61 = scmp.eq.s32.totalorder %s18, 7
      %p62 = por %p60, %p61
      %p64 = scmp.ne.s32.totalorder %s47, %s63
      %p65 = scmp.eq.s32.totalorder %s18, 0
      %p66 = por %p64, %p65
      %s67 = ssub.s32 %s19, %s38
      %p68 = scmp.eq.s32.totalorder %s67, 0
      %s70 = sadd.s32 %s69, 1
      %s71 = scalar_select %p68, %s69, %s70
      %p74 = pneg %p68
      %p75 = scmp.eq.s32.totalorder %s12, 7
      %p76 = por %p74, %p75
      %p77 = scmp.ne.s32.totalorder %s69, %s72
      %p78 = scmp.eq.s32.totalorder %s12, 0
      %p79 = por %p77, %p78
      %p80 = scmp.ne.s32.totalorder %s69, %s72
      %p81 = scmp.eq.s32.totalorder %s17, 7
      %p82 = por %p80, %p81
      %p83 = scmp.ne.s32.totalorder %s72, %s73
      %p84 = scmp.eq.s32.totalorder %s17, 0
      %p85 = por %p83, %p84
      %p86 = scmp.ne.s32.totalorder %s72, %s73
      %p87 = scmp.eq.s32.totalorder %s18, 7
      %p88 = por %p86, %p87
      %p90 = scmp.ne.s32.totalorder %s73, %s89
      %p91 = scmp.eq.s32.totalorder %s18, 0
      %p92 = por %p90, %p91
      %s93 = ssub.s32 %s19, %s38
      %s94 = ssub.s32 %s20, %s34
      %s95 = sor.u32 %s93, %s94
      %s96 = ssub.s32 %s21, %s30
      %s97 = sor.u32 %s95, %s96
      %p98 = scmp.eq.s32.totalorder %s97, 0
      %s100 = sadd.s32 %s99, 1
      %s101 = scalar_select %p98, %s99, %s100
      %p104 = pneg %p98
      %p105 = scmp.eq.s32.totalorder %s12, 7
      %p106 = por %p104, %p105
      %p107 = scmp.ne.s32.totalorder %s99, %s102
      %p108 = scmp.eq.s32.totalorder %s12, 0
      %p109 = por %p107, %p108
      %p110 = scmp.ne.s32.totalorder %s99, %s102
      %p111 = scmp.eq.s32.totalorder %s17, 7
      %p112 = por %p110, %p111
      %p113 = scmp.ne.s32.totalorder %s102, %s103
      %p114 = scmp.eq.s32.totalorder %s17, 0
      %p115 = por %p113, %p114
      %p116 = scmp.ne.s32.totalorder %s102, %s103
      %p117 = scmp.eq.s32.totalorder %s18, 7
      %p118 = por %p116, %p117
      %p120 = scmp.ne.s32.totalorder %s103, %s119
      %p121 = scmp.eq.s32.totalorder %s18, 0
      %p122 = por %p120, %p121
      %s123 = ssub.s32 %s19, %s38
      %s124 = ssub.s32 %s20, %s34
      %s125 = sor.u32 %s123, %s124
      %s126 = ssub.s32 %s21, %s30
      %s127 = sor.u32 %s125, %s126
      %p128 = scmp.eq.s32.totalorder %s127, 0
      %s130 = sadd.s32 %s129, 1
      %s131 = scalar_select %p128, %s129, %s130
      %p134 = pneg %p128
      %p135 = scmp.eq.s32.totalorder %s12, 7
      %p136 = por %p134, %p135
      %p137 = scmp.ne.s32.totalorder %s129, %s132
      %p138 = scmp.eq.s32.totalorder %s12, 0
      %p139 = por %p137, %p138
      %p140 = scmp.ne.s32.totalorder %s129, %s132
      %p141 = scmp.eq.s32.totalorder %s17, 7
      %p142 = por %p140, %p141
      %p143 = scmp.ne.s32.totalorder %s132, %s133
      %p144 = scmp.eq.s32.totalorder %s17, 0
      %p145 = por %p143, %p144
      %p146 = scmp.ne.s32.totalorder %s132, %s133
      %p147 = scmp.eq.s32.totalorder %s18, 7
      %p148 = por %p146, %p147
      %p150 = scmp.ne.s32.totalorder %s133, %s149
      %p151 = scmp.eq.s32.totalorder %s18, 0
      %p152 = por %p150, %p151
      %p153 = scmp.le.s32.totalorder 1, %s12
      %p154 = scmp.lt.s32.totalorder %s12, 9
      %p155 = pnand %p153, %p154
      %p156 = pneg %p155
      // Predicated region
      $region9: #{tpu_custom_call.1} parent=5 // pred_check
        _
      $region10: #{tpu_custom_call.1} parent=5 // pred_check_branch
        %158 = sbr.rel (%p155) target = $region12
      $region11: #{tpu_custom_call.1} parent=5 // pred_region
        %s159 = ssub.s32 %s12, 1
      $region12: #{tpu_custom_call.1} parent=5 // pred_fallthru
        _
      %p160 = scmp.lt.s32.totalorder %s12, 8
      // Predicated region
      $region13: #{tpu_custom_call.1} parent=5 // pred_check
        %p161 = pneg %p160
      $region14: #{tpu_custom_call.1} parent=5 // pred_check_branch
        %163 = sbr.rel (%p161) target = $region16
      $region15: #{tpu_custom_call.1} parent=5 // pred_region
        // Predicated region
        $region17: #{tpu_custom_call.1} parent=15 // pred_check
          %p164 = pneg %p53
        $region18: #{tpu_custom_call.1} parent=15 // pred_check_branch
          %166 = sbr.rel (%p164) target = $region20
        $region19: #{tpu_custom_call.1} parent=15 // pred_region
          %s167 = smul.u32 2, %s21
          %p168 = scmp.lt.s32.totalorder %s20, 1
          %s169 = scalar_select %p168, %s20, 1
          %p170 = scmp.lt.s32.totalorder %s167, 1
          %s171 = scalar_select %p170, %s167, 1
          %s172 = smul.addr %s169, 2
          %s173 = sadd.s32 %s171, %s172
          %s174 = smul.addr %s173, 8
          %s175 = scalar_lea.vmem %s0, %s174
          %s176 = smul.u32 2, %s21
        $region20: #{tpu_custom_call.1} parent=15 // pred_fallthru
          _
        // Predicated region
        $region21: #{tpu_custom_call.1} parent=15 // pred_check
          %p177 = pneg %p79
        $region22: #{tpu_custom_call.1} parent=15 // pred_check_branch
          %179 = sbr.rel (%p177) target = $region24
        $region23: #{tpu_custom_call.1} parent=15 // pred_region
          %p180 = scmp.lt.s32.totalorder %s19, 3
          %s181 = scalar_select %p180, %s19, 3
          %s182 = smul.addr %s181, 6
          %s183 = smul.addr %s182, 8
          %s184 = scalar_lea.vmem %s1, %s183
        $region24: #{tpu_custom_call.1} parent=15 // pred_fallthru
          _
        // Predicated region
        $region25: #{tpu_custom_call.1} parent=15 // pred_check
          %p185 = pneg %p109
        $region26: #{tpu_custom_call.1} parent=15 // pred_check_branch
          %187 = sbr.rel (%p185) target = $region28
        $region27: #{tpu_custom_call.1} parent=15 // pred_region
          %s188 = sand.u32 %s99, 1
          %s189 = scalar_lea.sflag [#allocation3], %s188
          %s190 = sand.u32 %s99, 1
          %s191 = smul.addr %s190, 48
          %s192 = scalar_lea.vmem [#allocation2], %s191
          %s193 = smul.u32 2, %s21
          %s195 = ssub.s32 768, 768
          %196 = vsyncadd %s189, %s195
          %s197 = smul.addr %s20, 6
          %s198 = sadd.s32 %s193, %s197
          %s199 = smul.addr %s19, 12
          %s200 = sadd.s32 %s198, %s199
          %s201 = smul.addr %s200, 128
          %s202 = scalar_lea.hbm %s2, %s201
          %s203 = sshll.u32 %s192, 4
          %s204 = int_to_ptr.vmem [resolvable:$true] %s203
          %209 = dma.hbm_to_vmem [thread:$0]  %s202, 768, %s204, %s189, 128, 128, 8
        $region28: #{tpu_custom_call.1} parent=15 // pred_fallthru
          _
      $region16: #{tpu_custom_call.1} parent=5 // pred_fallthru
        _
      %p210 = scmp.le.s32.totalorder 1, %s12
      %p211 = scmp.lt.s32.totalorder %s12, 9
      %p212 = pnand %p210, %p211
      %p213 = pneg %p212
      // Predicated region
      $region29: #{tpu_custom_call.1} parent=5 // pred_check
        _
      $region30: #{tpu_custom_call.1} parent=5 // pred_check_branch
        %215 = sbr.rel (%p212) target = $region32
      $region31: #{tpu_custom_call.1} parent=5 // pred_region
        %s216 = ssub.s32 %s12, 1
        %s217 = sand.u32 %s102, 1
        %s218 = scalar_lea.sflag [#allocation3], %s217
        %s219 = sand.u32 %s102, 1
        %s220 = smul.addr %s219, 48
        %s221 = scalar_lea.vmem [#allocation2], %s220
        // Predicated region
        $region33: #{tpu_custom_call.1} parent=31 // pred_check
          %p222 = pneg %p115
        $region34: #{tpu_custom_call.1} parent=31 // pred_check_branch
          %224 = sbr.rel (%p222) target = $region36
        $region35: #{tpu_custom_call.1} parent=31 // pred_region
          %225 = dma.done %s218, 768
        $region36: #{tpu_custom_call.1} parent=31 // pred_fallthru
          _
        %s226 = smul.u32 2, %s24
        %p227 = scmp.lt.s32.totalorder %s23, 1
        %s228 = scalar_select %p227, %s23, 1
        %p229 = scmp.lt.s32.totalorder %s226, 1
        %s230 = scalar_select %p229, %s226, 1
        %s231 = smul.addr %s228, 2
        %s232 = sadd.s32 %s230, %s231
        %s233 = smul.addr %s232, 8
        %s234 = scalar_lea.vmem %s0, %s233
        %p235 = pneg %p59
        %p236 = pneg %p56
        %p237 = scmp.lt.s32.totalorder %s22, 3
        %s238 = scalar_select %p237, %s22, 3
        %s239 = smul.addr %s238, 6
        %s240 = smul.addr %s239, 8
        %s241 = scalar_lea.vmem %s1, %s240
        %p242 = pneg %p85
        %p243 = pneg %p82
        %s244 = sand.u32 %s102, 1
        %s245 = scalar_lea.sflag [#allocation3], %s244
        %s246 = sand.u32 %s102, 1
        %s247 = smul.addr %s246, 48
        %s248 = scalar_lea.vmem [#allocation2], %s247
        %p249 = pneg %p115
        %p250 = pneg %p112
        %p251 = pneg %p145
        %p252 = pneg %p142
        %p253 = scmp.lt.s32.totalorder %s22, 3
        %s254 = scalar_select %p253, %s22, 3
        %p255 = scmp.lt.s32.totalorder %s23, 1
        %s256 = scalar_select %p255, %s23, 1
        %p257 = scmp.lt.s32.totalorder %s24, 0
        %s258 = scalar_select %p257, %s24, 0
        %s259 = sadd.s32 %s258, %s256
        %s260 = smul.addr %s254, 2
        %s261 = sadd.s32 %s259, %s260
        %s262 = smul.addr %s261, 4
        %s263 = scalar_lea.vmem %s3, %s262
        %s264 = smul.u32 2, %s24
        %p265 = scmp.lt.s32.totalorder %s23, 1
        %s266 = scalar_select %p265, %s23, 1
        %p267 = scmp.lt.s32.totalorder %s264, 1
        %s268 = scalar_select %p267, %s264, 1
        %s269 = smul.addr %s266, 2
        %s270 = sadd.s32 %s268, %s269
        %s271 = smul.addr %s270, 8
        %s272 = scalar_lea.vmem %s0, %s271
        %s273 = smul.u32 2, %s24
        %p274 = scmp.lt.s32.totalorder %s22, 3
        %s275 = scalar_select %p274, %s22, 3
        %s276 = smul.addr %s275, 6
        %s277 = smul.addr %s276, 8
        %s278 = scalar_lea.vmem %s1, %s277
        %s279 = smul.u32 2, %s24
        %p280 = scmp.lt.s32.totalorder %s22, 3
        %s281 = scalar_select %p280, %s22, 3
        %p282 = scmp.lt.s32.totalorder %s23, 1
        %s283 = scalar_select %p282, %s23, 1
        %p284 = scmp.lt.s32.totalorder %s24, 0
        %s285 = scalar_select %p284, %s24, 0
        %s286 = sadd.s32 %s285, %s283
        %s287 = smul.addr %s281, 2
        %s288 = sadd.s32 %s286, %s287
        %s289 = smul.addr %s288, 4
        %s290 = scalar_lea.vmem %s3, %s289
        %v291 = vld [vmem:[%s272] sm:$0xff]
        %v292 = vld [vmem:[%s272 + $0x8] sm:$0xff]
        %v293 = vld [vmem:[%s278] sm:$0xff]
        %v294 = vld [vmem:[%s278 + $0x8] sm:$0xff]
        %v295 = vld [vmem:[%s278 + $0x10] sm:$0xff]
        %v296 = vld [vmem:[%s278 + $0x18] sm:$0xff]
        %v297 = vld [vmem:[%s278 + $0x20] sm:$0xff]
        %v298 = vld [vmem:[%s278 + $0x28] sm:$0xff]
        %v299 = vld [vmem:[%s221] sm:$0xff]
        %v300 = vld [vmem:[%s221 + $0x8] sm:$0xff]
        %v301 = vld [vmem:[%s221 + $0x10] sm:$0xff]
        %v302 = vld [vmem:[%s221 + $0x18] sm:$0xff]
        %v303 = vld [vmem:[%s221 + $0x20] sm:$0xff]
        %v304 = vld [vmem:[%s221 + $0x28] sm:$0xff]
        %vm305 = vcmask 392192
        %v307 = vsel %vm305, %v299, 0
        %v310 = vsel %vm305, %v300, 0
        %v313 = vsel %vm305, %v301, 0
        %v316 = vsel %vm305, %v302, 0
        %v319 = vsel %vm305, %v303, 0
        %v322 = vsel %vm305, %v304, 0
        %324 = vmatprep.subr.mxu0 0.0
        %325 = vmatpush1.msra.mxu0 0.0
        %326 = vmatprep.subr.mxu0 0.0
        %327 = vmatpush1.msra.mxu0 0.0
        %328 = vmatprep.subr.mxu0 0.0
        %329 = vmatpush1.msra.mxu0 0.0
        %330 = vmatprep.subr.mxu0 0.0
        %331 = vmatpush1.msra.mxu0 0.0
        %332 = vmatprep.subr.mxu0 0.0
        %333 = vmatpush1.msra.mxu0 0.0
        %334 = vmatprep.subr.mxu0 0.0
        %335 = vmatpush1.msra.mxu0 0.0
        %336 = vmatprep.subr.mxu0 0.0
        %337 = vmatpush1.msra.mxu0 0.0
        %338 = vmatprep.subr.mxu0 0.0
        %339 = vmatpush1.msra.mxu0 0.0
        %340 = vmatprep.subr.mxu0 0.0
        %341 = vmatpush1.msra.mxu0 0.0
        %342 = vmatprep.subr.mxu0 0.0
        %343 = vmatpush1.msra.mxu0 0.0
        %344 = vmatprep.subr.mxu0 0.0
        %345 = vmatpush1.msra.mxu0 %v298
        %346 = vmatprep.subr.mxu0 0.0
        %347 = vmatpush1.msra.mxu0 %v297
        %348 = vmatprep.subr.mxu0 0.0
        %349 = vmatpush1.msra.mxu0 %v296
        %350 = vmatprep.subr.mxu0 0.0
        %351 = vmatpush1.msra.mxu0 %v295
        %352 = vmatprep.subr.mxu0 0.0
        %353 = vmatpush1.msra.mxu0 %v294
        %354 = vmatprep.subr.mxu0 0.0
        %355 = vmatpush1.msra.mxu0 %v293
        %356 = vmatprep.subr.mxu0 0.0
        %357 = vmatpush2.msra.mxu0 0.0
        %358 = vmatprep.subr.mxu0 0.0
        %359 = vmatpush2.msra.mxu0 0.0
        %360 = vmatprep.subr.mxu0 0.0
        %361 = vmatpush2.msra.mxu0 0.0
        %362 = vmatprep.subr.mxu0 0.0
        %363 = vmatpush2.msra.mxu0 0.0
        %364 = vmatprep.subr.mxu0 0.0
        %365 = vmatpush2.msra.mxu0 0.0
        %366 = vmatprep.subr.mxu0 0.0
        %367 = vmatpush2.msra.mxu0 0.0
        %368 = vmatprep.subr.mxu0 0.0
        %369 = vmatpush2.msra.mxu0 0.0
        %370 = vmatprep.subr.mxu0 0.0
        %371 = vmatpush2.msra.mxu0 0.0
        %372 = vmatprep.subr.mxu0 0.0
        %373 = vmatpush2.msra.mxu0 0.0
        %374 = vmatprep.subr.mxu0 0.0
        %375 = vmatpush2.msra.mxu0 0.0
        %376 = vmatprep.subr.mxu0 0.0
        %377 = vmatpush2.msra.mxu0 0.0
        %378 = vmatprep.subr.mxu0 0.0
        %379 = vmatpush2.msra.mxu0 0.0
        %380 = vmatprep.subr.mxu0 0.0
        %381 = vmatpush2.msra.mxu0 0.0
        %382 = vmatprep.subr.mxu0 0.0
        %383 = vmatpush2.msra.mxu0 0.0
        %384 = vmatprep.subr.mxu0 0.0
        %385 = vmatpush2.msra.mxu0 0.0
        %386 = vmatprep.subr.mxu0 0.0
        %387 = vmatpush2.msra.mxu0 0.0
        %388 = vmatprep.mubr.f32.mxu0 0.0
        %389 = vmatmul.mubr.f32.gmra.mxu0 %v307
        %v390 = vpop.f32.mrf.mxu0
        %v391 = vadd.f32 0.0, %v390
        %v392 = vpop.f32.mrf.mxu0
        %393 = vmatprep.mubr.f32.mxu0 0.0
        %394 = vmatmul.mubr.f32.gmra.mxu0 %v310
        %v395 = vpop.f32.mrf.mxu0
        %v396 = vadd.f32 0.0, %v395
        %v397 = vpop.f32.mrf.mxu0
        %398 = vmatprep.mubr.f32.mxu0 0.0
        %399 = vmatmul.mubr.f32.gmra.mxu0 %v313
        %v400 = vpop.f32.mrf.mxu0
        %v401 = vadd.f32 0.0, %v400
        %v402 = vpop.f32.mrf.mxu0
        %403 = vmatprep.mubr.f32.mxu0 0.0
        %404 = vmatmul.mubr.f32.gmra.mxu0 %v316
        %v405 = vpop.f32.mrf.mxu0
        %v406 = vadd.f32 0.0, %v405
        %v407 = vpop.f32.mrf.mxu0
        %408 = vmatprep.mubr.f32.mxu0 0.0
        %409 = vmatmul.mubr.f32.gmra.mxu0 %v319
        %v410 = vpop.f32.mrf.mxu0
        %v411 = vadd.f32 0.0, %v410
        %v412 = vpop.f32.mrf.mxu0
        %413 = vmatprep.mubr.f32.mxu0 0.0
        %414 = vmatmul.mubr.f32.gmra.mxu0 %v322
        %v415 = vpop.f32.mrf.mxu0
        %v416 = vadd.f32 0.0, %v415
        %v417 = vpop.f32.mrf.mxu0
        %418 = vdwg.mxu0
        %v419 = vmul.f32 %v391, %v291
        %v420 = vmul.f32 %v396, %v292
        %v421 = vmul.f32 %v401, %v291
        %v422 = vmul.f32 %v406, %v292
        %v423 = vmul.f32 %v411, %v291
        %v424 = vmul.f32 %v416, %v292
        %vm425 = vcmask 261120
        %v426 = vsel %vm425, %v419, 0.0
        %427 = vadd.xlane.f32.xlu0 %v426
        %v428 = vpop.xlane.xlu0 %427
        %v429 = vsel %vm425, %v420, 0.0
        %430 = vadd.xlane.f32.xlu0 %v429
        %v431 = vpop.xlane.xlu0 %430
        %v432 = vsel %vm425, %v421, 0.0
        %433 = vadd.xlane.f32.xlu0 %v432
        %v434 = vpop.xlane.xlu0 %433
        %v435 = vsel %vm425, %v422, 0.0
        %436 = vadd.xlane.f32.xlu0 %v435
        %v437 = vpop.xlane.xlu0 %436
        %v438 = vsel %vm425, %v423, 0.0
        %439 = vadd.xlane.f32.xlu0 %v438
        %v440 = vpop.xlane.xlu0 %439
        %v441 = vsel %vm425, %v424, 0.0
        %442 = vadd.xlane.f32.xlu0 %v441
        %v443 = vpop.xlane.xlu0 %442
        %v444 = vmul.f32 %v428, 0.020833334
        %v445 = vmul.f32 %v431, 0.020833334
        %v446 = vmul.f32 %v434, 0.020833334
        %v447 = vmul.f32 %v437, 0.020833334
        %v448 = vmul.f32 %v440, 0.020833334
        %v449 = vmul.f32 %v443, 0.020833334
        %v456 = vlaneseq
        %v457 = vand.u32 %v456, 127
        %v458 = vlaneseq
        %v459 = vshrl.u32 %v458, 7
        %v460 = vsub.s32 %v457, %v459
        %v461 = vrot.slane %v444, %v460
        %v462 = vadd.s32 %v457, 4294967288
        %v463 = vlaneseq
        %v464 = vshrl.u32 %v463, 7
        %v465 = vsub.s32 %v462, %v464
        %v466 = vrot.slane %v445, %v465
        %vm467 = vcmask 130112
        %v468 = vsel %vm467, %v466, %v461
        %v469 = vlaneseq
        %v470 = vshrl.u32 %v469, 7
        %v471 = vsub.s32 %v457, %v470
        %v472 = vrot.slane %v446, %v471
        %v473 = vlaneseq
        %v474 = vshrl.u32 %v473, 7
        %v475 = vsub.s32 %v462, %v474
        %v476 = vrot.slane %v447, %v475
        %v477 = vsel %vm467, %v476, %v472
        %v478 = vlaneseq
        %v479 = vshrl.u32 %v478, 7
        %v480 = vsub.s32 %v457, %v479
        %v481 = vrot.slane %v448, %v480
        %v482 = vlaneseq
        %v483 = vshrl.u32 %v482, 7
        %v484 = vsub.s32 %v462, %v483
        %v485 = vrot.slane %v449, %v484
        %v486 = vsel %vm467, %v485, %v481
        %vm487 = vcmask 1041409
        %v488 = vsel %vm487, %v477, %v468
        %vm489 = vcmask 1042434
        %v490 = vsel %vm489, %v486, %v488
        %vm492 = vcmask 124928
        %493 = vst.msk [vmem:[%s290] sm:$0x7] %vm492, %v490
        %p494 = scmp.lt.s32.totalorder %s22, 3
        %s495 = scalar_select %p494, %s22, 3
        %p496 = scmp.lt.s32.totalorder %s23, 1
        %s497 = scalar_select %p496, %s23, 1
        %p498 = scmp.lt.s32.totalorder %s24, 0
        %s499 = scalar_select %p498, %s24, 0
        %s500 = sadd.s32 %s499, %s497
        %s501 = smul.addr %s495, 2
        %s502 = sadd.s32 %s500, %s501
        %s503 = smul.addr %s502, 4
        %s504 = scalar_lea.vmem %s3, %s503
        // Predicated region
        $region37: #{tpu_custom_call.1} parent=31 // pred_check
          %p505 = pneg %p142
        $region38: #{tpu_custom_call.1} parent=31 // pred_check_branch
          %507 = sbr.rel (%p505) target = $region40
        $region39: #{tpu_custom_call.1} parent=31 // pred_region
          _
        $region40: #{tpu_custom_call.1} parent=31 // pred_fallthru
          _
      $region32: #{tpu_custom_call.1} parent=5 // pred_fallthru
        _
      %p508 = scmp.le.s32.totalorder 2, %s12
      // Predicated region
      $region41: #{tpu_custom_call.1} parent=5 // pred_check
        %p509 = pneg %p508
      $region42: #{tpu_custom_call.1} parent=5 // pred_check_branch
        %511 = sbr.rel (%p509) target = $region44
      $region43: #{tpu_custom_call.1} parent=5 // pred_region
        %s512 = ssub.s32 %s12, 2
        // Predicated region
        $region45: #{tpu_custom_call.1} parent=43 // pred_check
          %p513 = pneg %p148
        $region46: #{tpu_custom_call.1} parent=43 // pred_check_branch
          %515 = sbr.rel (%p513) target = $region48
        $region47: #{tpu_custom_call.1} parent=43 // pred_region
          %p516 = scmp.lt.s32.totalorder %s25, 3
          %s517 = scalar_select %p516, %s25, 3
          %p518 = scmp.lt.s32.totalorder %s26, 1
          %s519 = scalar_select %p518, %s26, 1
          %p520 = scmp.lt.s32.totalorder %s27, 0
          %s521 = scalar_select %p520, %s27, 0
          %s522 = sadd.s32 %s521, %s519
          %s523 = smul.addr %s517, 2
          %s524 = sadd.s32 %s522, %s523
          %s525 = smul.addr %s524, 4
          %s526 = scalar_lea.vmem %s3, %s525
        $region48: #{tpu_custom_call.1} parent=43 // pred_fallthru
          _
      $region44: #{tpu_custom_call.1} parent=5 // pred_fallthru
        _
    $region6: #{tpu_custom_call.1} parent=1 // loop_footer
      %s16 = sadd.s32 1, %s12
    $region7: #{tpu_custom_call.1} parent=1 // loop_footer_branch
      %11 = sbr.rel target = $region3
    $region8: #{tpu_custom_call.1} parent=1 // loop_exit
      _
    %527 = vsyncpa [#allocation3], 1
    %s528 = scalar_lea.sflag [#allocation3], 1
    %529 = vsyncpa %s528, 1

</llo_original>
